<compile_context>
chip_gen: v5e
topology: v5e:2x2
jax: 0.10.0
libtpu: 0.0.40
codegen_flags: <defaults>
</compile_context>

<pallas_src>
import functools

import jax
import jax.numpy as jnp
from jax.experimental import pallas as pl
from jax.experimental.pallas import tpu as pltpu


def _round_up(x, m):
    return ((x + m - 1) // m) * m


def _pick_tile(n_pad, target):
    """Largest divisor of n_pad that is a multiple of 128 and <= target."""
    best = 128
    d = 128
    while d <= min(target, n_pad):
        if n_pad % d == 0:
            best = d
        d += 128
    return best


def _vmem_limit_bytes():
    """Generation-aware VMEM limit: ~2/3 of physical (v7x 64MiB -> ~42MiB,
    v5e/v6e 128MiB -> ~85MiB).  Falls back to the smallest (v7x) budget."""
    phys = 64 * 1024 * 1024
    try:
        phys = int(getattr(pltpu.get_tpu_info(), "vmem_capacity_bytes", phys))
    except Exception:
        pass
    return int(phys * 2 // 3)


# ----------------------------- kernels --------------------------------------


def _proj_kernel(x_ref, wpq_ref, p_ref, q_ref):
    """[p | q] = x @ [Wp | Wq] (bias=False); dropout1/2 identity (eval).
    Single 2*H-wide matmul fills the full 256-wide MXU output on v6e/v7x."""
    h = p_ref.shape[-1]
    pq = jnp.dot(x_ref[...], wpq_ref[...], preferred_element_type=jnp.float32)
    p_ref[...] = pq[:, :h]
    q_ref[...] = pq[:, h:]


def _layer_kernel(ids_ref, cnt_ref, adj_ref, q_src_ref, p_ref, q_ref,
                  wup_ref, wdn_ref, p_out_ref, q_out_ref, acc_ref, *, apply_act):
    """One fused SGNN layer for a tile of dst rows.

    grid = (dst_row_tiles, src_col_tiles).  The src axis is a reduction over
    the *nonzero* adjacency column tiles of this row band (block-sparse,
    driven by scalar-prefetched ids/cnt); f32 VMEM accumulator with pl.when
    init/finalize.  msgs = q[src] @ W_up is recomputed in-place (no HBM
    round-trip).  Residual carries stay f32; MXU operands are bf16.
    """
    i = pl.program_id(0)
    k = pl.program_id(1)

    @pl.when(k == 0)
    def _():
        acc_ref[...] = jnp.zeros_like(acc_ref)

    # Neighbor "add" aggregation over nonzero adjacency tiles only.
    @pl.when(k < cnt_ref[i])
    def _():
        msgs = jnp.dot(q_src_ref[...].astype(jnp.bfloat16), wup_ref[...],
                       preferred_element_type=jnp.float32).astype(jnp.bfloat16)
        adj_bf16 = adj_ref[...].astype(jnp.float32).astype(jnp.bfloat16)
        acc_ref[...] += jnp.dot(adj_bf16, msgs,
                                preferred_element_type=jnp.float32)

    @pl.when(k == pl.num_programs(1) - 1)
    def _():
        # LAMessagePassingUp momentum update.
        p_new = p_ref[...] + acc_ref[...]
        # LAMessagePassingDown_NoInteraction position update (no neighbors).
        q_new = q_ref[...] + jnp.dot(p_new.astype(jnp.bfloat16), wdn_ref[...],
                                     preferred_element_type=jnp.float32)
        if apply_act:  # ActivationUpModule / ActivationDownModule
            p_new = jnp.tanh(p_new)
            q_new = jnp.tanh(q_new)
        p_out_ref[...] = p_new
        q_out_ref[...] = q_new


def _classifier_kernel(q_ref, wout_ref, b_ref, out_ref):
    """out = q @ W_out + b (lane-dense C_pad >= 128 output)."""
    out_ref[...] = (jnp.dot(q_ref[...].astype(jnp.bfloat16), wout_ref[...],
                            preferred_element_type=jnp.float32)
                    + b_ref[...])


# ----------------------------- wrapper ---------------------------------------


def sgnn_no_interaction(x, adj, params, *, row_tile=512, col_tile=512):
    """Forward pass.  x: (N, F) f32, adj: (N, N) f32 dense adjacency (counts)."""
    N, F = x.shape
    H = params["w_p"].shape[1]
    C = params["w_out"].shape[1]
    L = params["w_up"].shape[0]

    f32 = jnp.float32
    bf16 = jnp.bfloat16

    # Lane-dense padding of feature/hidden/class dims (zero pad -> exact).
    F_pad = _round_up(F, 128)
    H_pad = _round_up(H, 128)
    C_pad = _round_up(C, 128)
    # Pad N only to 128; tiles are divisors of N_pad (no quadratic pad waste).
    N_pad = _round_up(N, 128)

    TR = _pick_tile(N_pad, row_tile)
    # v7x megacore: keep >= 2 row tiles when possible so the "parallel" row
    # axis shards across both TensorCores.
    if N_pad // TR < 2 and N_pad >= 256:
        TR = _pick_tile(N_pad, N_pad // 2)
    TC = _pick_tile(N_pad, col_tile)
    n_row = N_pad // TR
    n_col = N_pad // TC

    pad2 = lambda a, r, c: jnp.pad(a, ((0, r - a.shape[0]), (0, c - a.shape[1])))

    # Inputs / weights: bf16 MXU operands pre-cast in the wrapper.
    x_p = pad2(x.astype(f32), N_pad, F_pad).astype(bf16)
    adj_pad = pad2(adj.astype(f32), N_pad, N_pad)
    # int8 adjacency: exact for integer edge multiplicities <= 127 (halves the
    # dominant HBM stream vs bf16; widened to bf16 in-kernel before the dot).
    adj_i8 = adj_pad.astype(jnp.int8)

    w_pq = jnp.concatenate(
        [pad2(params["w_p"], F_pad, H_pad), pad2(params["w_q"], F_pad, H_pad)],
        axis=1).astype(bf16)                                        # (F, 2H)
    w_up = jnp.pad(params["w_up"],
                   ((0, 0), (0, H_pad - H), (0, H_pad - H))).astype(bf16)
    w_dn = jnp.pad(params["w_down"],
                   ((0, 0), (0, H_pad - H), (0, H_pad - H))).astype(bf16)
    w_out = pad2(params["w_out"], H_pad, C_pad).astype(bf16)
    b_out = pad2(params["b_out"], 1, C_pad)                          # f32

    # Block-sparse occupancy: per dst-row tile, the nonzero src-col tiles.
    blk = (adj_pad != 0).reshape(n_row, TR, n_col, TC).any(axis=(1, 3))
    cnt = blk.sum(axis=1).astype(jnp.int32)                          # (n_row,)
    j = jnp.arange(n_col, dtype=jnp.int32)[None, :]
    order = jnp.argsort(jnp.where(blk, j, j + n_col), axis=1).astype(jnp.int32)
    last = jnp.maximum(cnt[:, None] - 1, 0)
    # ids[i, k]: k-th nonzero col-tile for row band i; padded steps repeat the
    # last valid index so the pipeliner skips the re-DMA of that tile.
    ids = jnp.where(j < cnt[:, None], order,
                    jnp.take_along_axis(order, last, axis=1)).astype(jnp.int32)

    vmem_limit = _vmem_limit_bytes()
    cp_par = pltpu.CompilerParams(dimension_semantics=("parallel",),
                                  vmem_limit_bytes=vmem_limit)
    cp_layer = pltpu.CompilerParams(dimension_semantics=("parallel", "arbitrary"),
                                    vmem_limit_bytes=vmem_limit)

    row_spec_h = pl.BlockSpec((TR, H_pad), lambda i: (i, 0))

    # -- input projections (dropout is identity in eval mode) ------------------
    p, q = pl.pallas_call(
        _proj_kernel,
        out_shape=(jax.ShapeDtypeStruct((N_pad, H_pad), f32),
                   jax.ShapeDtypeStruct((N_pad, H_pad), f32)),
        grid=(n_row,),
        in_specs=[pl.BlockSpec((TR, F_pad), lambda i: (i, 0)),
                  pl.BlockSpec((F_pad, 2 * H_pad), lambda i: (0, 0))],
        out_specs=(row_spec_h, row_spec_h),
        compiler_params=cp_par,
    )(x_p, w_pq)

    layer_act = functools.partial(_layer_kernel, apply_act=True)
    layer_noact = functools.partial(_layer_kernel, apply_act=False)

    # -- SGNN layers: one fused pallas_call per layer ---------------------------
    for l in range(L):
        apply_act = l < L - 1
        cost = pl.CostEstimate(
            flops=(2 * N_pad * N_pad * H_pad            # aggregation (dense bound)
                   + 2 * n_row * N_pad * H_pad * H_pad  # fused msgs recompute
                   + 2 * N_pad * H_pad * H_pad),        # W_down update
            transcendentals=(2 * N_pad * H_pad) if apply_act else 0,
            bytes_accessed=(N_pad * N_pad * 1           # int8 adjacency
                            + n_row * N_pad * H_pad * 4  # q src re-read
                            + 4 * N_pad * H_pad * 4      # p/q in + p/q out
                            + 2 * H_pad * H_pad * 2),    # W_up / W_down
        )
        grid_spec = pltpu.PrefetchScalarGridSpec(
            num_scalar_prefetch=2,
            grid=(n_row, n_col),
            in_specs=[
                # adjacency tile (block-sparse col-tile indexing)
                pl.BlockSpec((TR, TC), lambda i, k, ids, cnt: (i, ids[i, k])),
                # q, src-indexed, for the fused msgs = q[src] @ W_up
                pl.BlockSpec((TC, H_pad), lambda i, k, ids, cnt: (ids[i, k], 0)),
                # p, q dst tiles (residual carries, f32)
                pl.BlockSpec((TR, H_pad), lambda i, k, ids, cnt: (i, 0)),
                pl.BlockSpec((TR, H_pad), lambda i, k, ids, cnt: (i, 0)),
                # per-layer weights, resident
                pl.BlockSpec((H_pad, H_pad), lambda i, k, ids, cnt: (0, 0)),
                pl.BlockSpec((H_pad, H_pad), lambda i, k, ids, cnt: (0, 0)),
            ],
            out_specs=(pl.BlockSpec((TR, H_pad), lambda i, k, ids, cnt: (i, 0)),
                       pl.BlockSpec((TR, H_pad), lambda i, k, ids, cnt: (i, 0))),
            scratch_shapes=[pltpu.VMEM((TR, H_pad), f32)],
        )
        p, q = pl.pallas_call(
            layer_act if apply_act else layer_noact,
            out_shape=(jax.ShapeDtypeStruct((N_pad, H_pad), f32),
                       jax.ShapeDtypeStruct((N_pad, H_pad), f32)),
            grid_spec=grid_spec,
            compiler_params=cp_layer,
            cost_estimate=cost,
        )(ids, cnt, adj_i8, q, p, q, w_up[l], w_dn[l])

    # -- classifier -------------------------------------------------------------
    out = pl.pallas_call(
        _classifier_kernel,
        out_shape=jax.ShapeDtypeStruct((N_pad, C_pad), f32),
        grid=(n_row,),
        in_specs=[row_spec_h,
                  pl.BlockSpec((H_pad, C_pad), lambda i: (0, 0)),
                  pl.BlockSpec((1, C_pad), lambda i: (0, 0))],
        out_specs=pl.BlockSpec((TR, C_pad), lambda i: (i, 0)),
        compiler_params=cp_par,
    )(q, w_out, b_out)

    return out[:N, :C]


# ----------------------------- reference & glue ------------------------------


def sgnn_reference(x, adj, params):
    """Pure-JAX reference with identical (assumed) semantics, f32 throughout."""
    p = x @ params["w_p"]
    q = x @ params["w_q"]
    L = params["w_up"].shape[0]
    for l in range(L):
        p = p + adj @ (q @ params["w_up"][l])
        q = q + p @ params["w_down"][l]
        if l < L - 1:
            p = jnp.tanh(p)
            q = jnp.tanh(q)
    return q @ params["w_out"] + params["b_out"]


def make_params(key, num_features, hidden, num_classes, num_h_layers):
    """Deterministic synthetic parameters (weights stored pre-transposed
    as (in, out) so the kernel does x @ W)."""
    ks = jax.random.split(key, 6)
    L = num_h_layers + 1
    s_in = 1.0 / jnp.sqrt(num_features)
    s_h = 1.0 / jnp.sqrt(hidden)
    return {
        "w_p":    jax.random.normal(ks[0], (num_features, hidden), jnp.float32) * s_in,
        "w_q":    jax.random.normal(ks[1], (num_features, hidden), jnp.float32) * s_in,
        "w_up":   jax.random.normal(ks[2], (L, hidden, hidden), jnp.float32) * s_h,
        "w_down": jax.random.normal(ks[3], (L, hidden, hidden), jnp.float32) * s_h,
        "w_out":  jax.random.normal(ks[4], (hidden, num_classes), jnp.float32) * s_h,
        "b_out":  jax.random.normal(ks[5], (1, num_classes), jnp.float32) * 0.01,
    }


def edge_index_to_dense_adj(edge_index, num_nodes):
    """edge_index: (2, E) int32, row 0 = src, row 1 = dst.  A[dst, src] += 1
    (PyG 'add' aggregation counts edge multiplicity).  NOTE: the kernel stores
    A as int8, exact for multiplicities <= 127 (typical graphs: 1)."""
    src, dst = edge_index[0], edge_index[1]
    adj = jnp.zeros((num_nodes, num_nodes), jnp.float32)
    return adj.at[dst, src].add(1.0)
    # TODO(synk): add self-loops here if the real LAMessagePassingUp uses them.


if __name__ == "__main__":
    # Small deterministic example consistent with the module's forward:
    # x: (num_nodes, num_features), edge_index: (2, E)
    num_nodes = 16
    num_features = 8
    hidden = 32
    num_classes = 4
    num_h_layers = 2

    key = jax.random.PRNGKey(0)
    kx, kp = jax.random.split(key)

    x = jax.random.normal(kx, (num_nodes, num_features), jnp.float32)

    # Bidirectional ring graph.
    src = jnp.arange(num_nodes, dtype=jnp.int32)
    dst = (src + 1) % num_nodes
    edge_index = jnp.concatenate(
        [jnp.stack([src, dst]), jnp.stack([dst, src])], axis=1)  # (2, 2N)

    adj = edge_index_to_dense_adj(edge_index, num_nodes)
    params = make_params(kp, num_features, hidden, num_classes, num_h_layers)

    out = sgnn_no_interaction(x, adj, params)
    out = jax.block_until_ready(out)

    ref = sgnn_reference(x, adj, params)
    assert out.shape == (num_nodes, num_classes)
    assert jnp.all(jnp.isfinite(out))
    # bf16-operand / f32-accumulate kernel vs f32 reference: generous tolerance.
    assert jnp.allclose(out, ref, atol=0.2, rtol=0.1), float(jnp.max(jnp.abs(out - ref)))
    print("KERNEL_OK")
</pallas_src>

<mosaic_0001>
module attributes {stable_mosaic.version = 11 : i64} {
  func.func @_proj_kernel(%arg0: i32, %arg1: memref<128x128xbf16, #tpu.memory_space<vmem>>, %arg2: memref<128x256xbf16, #tpu.memory_space<vmem>>, %arg3: memref<128x128xf32, #tpu.memory_space<vmem>>, %arg4: memref<128x128xf32, #tpu.memory_space<vmem>>) attributes {dimension_semantics = [#tpu.dimension_semantics<parallel>], iteration_bounds = array<i64: 1>, scalar_prefetch = 0 : i64, scratch_operands = 0 : i64, tpu.core_type = #tpu.core_type<tc>, window_params = [{transform_indices = @transform_0, window_bounds = array<i64: 128, 128>}, {pipeline_mode = #tpu.pipeline_mode<synchronous>, transform_indices = @transform_1, window_bounds = array<i64: 128, 256>}, {transform_indices = @transform_2, window_bounds = array<i64: 128, 128>}, {transform_indices = @transform_3, window_bounds = array<i64: 128, 128>}]} {
    %c0 = arith.constant 0 : index
    %c0_0 = arith.constant 0 : index
    %0 = vector.load %arg1[%c0, %c0_0] : memref<128x128xbf16, #tpu.memory_space<vmem>>, vector<128x128xbf16>
    %c0_1 = arith.constant 0 : index
    %c0_2 = arith.constant 0 : index
    %1 = vector.load %arg2[%c0_1, %c0_2] : memref<128x256xbf16, #tpu.memory_space<vmem>>, vector<128x256xbf16>
    %cst = arith.constant dense<0.000000e+00> : vector<128x256xf32>
    %2 = tpu.matmul %0, %1, %cst {dimension_numbers = #tpu.dot_dimension_numbers<[1], [0], [0], [1], [0, 0, 1, 1], [], []>} : vector<128x128xbf16>, vector<128x256xbf16>, vector<128x256xf32> -> vector<128x256xf32>
    %3 = vector.extract_strided_slice %2 {offsets = [0, 0], sizes = [128, 128], strides = [1, 1]} : vector<128x256xf32> to vector<128x128xf32>
    %c0_3 = arith.constant 0 : index
    %c0_4 = arith.constant 0 : index
    %4 = vector.load %arg3[%c0_3, %c0_4] : memref<128x128xf32, #tpu.memory_space<vmem>>, vector<128x128xf32>
    tpu.vector_store %arg3[%c0_3, %c0_4], %3 {strides = array<i32>} : memref<128x128xf32, #tpu.memory_space<vmem>>, vector<128x128xf32>,
    %5 = vector.extract_strided_slice %2 {offsets = [0, 128], sizes = [128, 128], strides = [1, 1]} : vector<128x256xf32> to vector<128x128xf32>
    %c0_5 = arith.constant 0 : index
    %c0_6 = arith.constant 0 : index
    %6 = vector.load %arg4[%c0_5, %c0_6] : memref<128x128xf32, #tpu.memory_space<vmem>>, vector<128x128xf32>
    tpu.vector_store %arg4[%c0_5, %c0_6], %5 {strides = array<i32>} : memref<128x128xf32, #tpu.memory_space<vmem>>, vector<128x128xf32>,
    return
  }
  func.func @transform_0(%arg0: i32) -> (i32, i32) {
    %c0_i32 = arith.constant 0 : i32
    %c0_i32_0 = arith.constant 0 : i32
    return %arg0, %c0_i32 : i32, i32
  }
  func.func @transform_1(%arg0: i32) -> (i32, i32) {
    %c0_i32 = arith.constant 0 : i32
    %c0_i32_0 = arith.constant 0 : i32
    %c0_i32_1 = arith.constant 0 : i32
    return %c0_i32, %c0_i32_0 : i32, i32
  }
  func.func @transform_2(%arg0: i32) -> (i32, i32) {
    %c0_i32 = arith.constant 0 : i32
    %c0_i32_0 = arith.constant 0 : i32
    return %arg0, %c0_i32 : i32, i32
  }
  func.func @transform_3(%arg0: i32) -> (i32, i32) {
    %c0_i32 = arith.constant 0 : i32
    %c0_i32_0 = arith.constant 0 : i32
    return %arg0, %c0_i32 : i32, i32
  }
}

</mosaic_0001>

<llo_original>
// kernel: tpu_custom_call.1
$region0: #{tpu_custom_call.1}
  #allocation0 [shape = 'u32[]', space=smem, size = 0x4, offset = 0x4, fixed_abs, tag = 'smem constant byte address 0x4 - core index']
  #allocation1 [shape = 'u32[72,128]{1,0:T(1,128)}', space=vmem, size = 0x9000, scoped, tag = 'internal scratch']
  %s0 = inlined_call_operand.hbm [shape: bf16[128,128], index: 0, kind: input, shape index: {}]
  %s1 = inlined_call_operand.hbm [shape: bf16[128,256], index: 1, kind: input, shape index: {}]
  %s2 = inlined_call_operand.hbm [shape: f32[128,128], index: 2, kind: output, shape index: {0}]
  %s3 = inlined_call_operand.hbm [shape: f32[128,128], index: 3, kind: output, shape index: {1}]
  %4 = xla_tuple %s2, %s3
  %s5 = sld [smem:[#allocation0]]
  $region34: #{tpu_custom_call.1} parent=0
    _
  %s7 = ssub.s32 1, %s5
  %s8 = scalar_select 0, %s7, %s5
  $region1: #{tpu_custom_call.1} parent=0
    #allocation2 [shape = 'u8[32768]{0}', space=vmem, size = 0x8000, scoped, tag = 'input window, operand 0, single buffered']
    #allocation3 [shape = 's32[1]{0}', space=sflag, size = 0x4, scoped, tag = 'scoped memory for tpu_custom_call.1']
    #allocation4 [shape = 's32[1]{0}', space=sflag, size = 0x4, scoped, tag = 'scoped memory for tpu_custom_call.1']
    #allocation5 [shape = 'u8[65536]{0}', space=vmem, size = 0x10000, scoped, tag = 'input window, operand 1, single buffered']
    #allocation6 [shape = 's32[1]{0}', space=sflag, size = 0x4, scoped, tag = 'scoped memory for tpu_custom_call.1']
    #allocation7 [shape = 'u8[65536]{0}', space=vmem, size = 0x10000, scoped, tag = 'output window, operand 0, single buffered']
    #allocation8 [shape = 'u8[65536]{0}', space=vmem, size = 0x10000, scoped, tag = 'output window, operand 1, single buffered']
    #allocation9 [shape = 's32[1]{0}', space=sflag, size = 0x4, scoped, tag = 'scoped memory for tpu_custom_call.1']
    %9 = vsyncpa [#allocation3], 0
    %10 = vsyncpa [#allocation6], 0
    %11 = vsyncpa [#allocation4], 0
    %12 = vsyncpa [#allocation9], 0
    // Predicated region
    $region2: #{tpu_custom_call.1} parent=1 // pred_check
      _
    $region3: #{tpu_custom_call.1} parent=1 // pred_check_branch
      %14 = sbr.rel (0) target = $region5
    $region4: #{tpu_custom_call.1} parent=1 // pred_region
      %16 = vsyncadd [#allocation3], 0
      %s17 = sshll.u32 %s0, 4
      %s18 = int_to_ptr.hbm [resolvable:$true] %s17
      %s19 = sshll.u32 [#allocation2], 4
      %s20 = int_to_ptr.vmem [resolvable:$true] %s19
      %25 = dma.hbm_to_vmem [thread:$0]  %s18, 1024, %s20, [#allocation3], 64, 64, 4
    $region5: #{tpu_custom_call.1} parent=1 // pred_fallthru
      _
    // Predicated region
    $region6: #{tpu_custom_call.1} parent=1 // pred_check
      _
    $region7: #{tpu_custom_call.1} parent=1 // pred_check_branch
      %27 = sbr.rel (0) target = $region9
    $region8: #{tpu_custom_call.1} parent=1 // pred_region
      %29 = vsyncadd [#allocation6], 0
      %s30 = sshll.u32 %s1, 4
      %s31 = int_to_ptr.hbm [resolvable:$true] %s30
      %s32 = sshll.u32 [#allocation5], 4
      %s33 = int_to_ptr.vmem [resolvable:$true] %s32
      %38 = dma.hbm_to_vmem [thread:$0]  %s31, 2048, %s33, [#allocation6], 128, 128, 8
    $region9: #{tpu_custom_call.1} parent=1 // pred_fallthru
      _
    // Predicated region
    $region10: #{tpu_custom_call.1} parent=1 // pred_check
      _
    $region11: #{tpu_custom_call.1} parent=1 // pred_check_branch
      %40 = sbr.rel (0) target = $region13
    $region12: #{tpu_custom_call.1} parent=1 // pred_region
      %42 = dma.done [#allocation3], 1024
    $region13: #{tpu_custom_call.1} parent=1 // pred_fallthru
      _
    // Predicated region
    $region14: #{tpu_custom_call.1} parent=1 // pred_check
      _
    $region15: #{tpu_custom_call.1} parent=1 // pred_check_branch
      %44 = sbr.rel (0) target = $region17
    $region16: #{tpu_custom_call.1} parent=1 // pred_region
      %46 = dma.done [#allocation6], 2048
    $region17: #{tpu_custom_call.1} parent=1 // pred_fallthru
      _
    %v47 = vld [vmem:[#allocation2] sm:$0xf]
    %v48 = vld [vmem:[#allocation2 + $0x4] sm:$0xf]
    %v49 = vld [vmem:[#allocation2 + $0x8] sm:$0xf]
    %v50 = vld [vmem:[#allocation2 + $0xc] sm:$0xf]
    %v51 = vld [vmem:[#allocation2 + $0x10] sm:$0xf]
    %v52 = vld [vmem:[#allocation2 + $0x14] sm:$0xf]
    %v53 = vld [vmem:[#allocation2 + $0x18] sm:$0xf]
    %v54 = vld [vmem:[#allocation2 + $0x1c] sm:$0xf]
    %v55 = vld [vmem:[#allocation2 + $0x20] sm:$0xf]
    %v56 = vld [vmem:[#allocation2 + $0x24] sm:$0xf]
    %v57 = vld [vmem:[#allocation2 + $0x28] sm:$0xf]
    %v58 = vld [vmem:[#allocation2 + $0x2c] sm:$0xf]
    %v59 = vld [vmem:[#allocation2 + $0x30] sm:$0xf]
    %v60 = vld [vmem:[#allocation2 + $0x34] sm:$0xf]
    %v61 = vld [vmem:[#allocation2 + $0x38] sm:$0xf]
    %v62 = vld [vmem:[#allocation2 + $0x3c] sm:$0xf]
    %v63 = vld [vmem:[#allocation5] sm:$0xff]
    %v64 = vld [vmem:[#allocation5 + $0x8] sm:$0xff]
    %v65 = vld [vmem:[#allocation5 + $0x10] sm:$0xff]
    %v66 = vld [vmem:[#allocation5 + $0x18] sm:$0xff]
    %v67 = vld [vmem:[#allocation5 + $0x20] sm:$0xff]
    %v68 = vld [vmem:[#allocation5 + $0x28] sm:$0xff]
    %v69 = vld [vmem:[#allocation5 + $0x30] sm:$0xff]
    %v70 = vld [vmem:[#allocation5 + $0x38] sm:$0xff]
    %v71 = vld [vmem:[#allocation5 + $0x40] sm:$0xff]
    %v72 = vld [vmem:[#allocation5 + $0x48] sm:$0xff]
    %v73 = vld [vmem:[#allocation5 + $0x50] sm:$0xff]
    %v74 = vld [vmem:[#allocation5 + $0x58] sm:$0xff]
    %v75 = vld [vmem:[#allocation5 + $0x60] sm:$0xff]
    %v76 = vld [vmem:[#allocation5 + $0x68] sm:$0xff]
    %v77 = vld [vmem:[#allocation5 + $0x70] sm:$0xff]
    %v78 = vld [vmem:[#allocation5 + $0x78] sm:$0xff]
    %v95 = vunpack.c.l.b16 %v47
    %v96 = vunpack.c.l.b16 %v48
    %v97 = vunpack.c.l.b16 %v49
    %v98 = vunpack.c.l.b16 %v50
    %v99 = vunpack.c.l.b16 %v51
    %v100 = vunpack.c.l.b16 %v52
    %v101 = vunpack.c.l.b16 %v53
    %v102 = vunpack.c.l.b16 %v54
    %v103 = vunpack.c.l.b16 %v55
    %v104 = vunpack.c.l.b16 %v56
    %v105 = vunpack.c.l.b16 %v57
    %v106 = vunpack.c.l.b16 %v58
    %v107 = vunpack.c.l.b16 %v59
    %v108 = vunpack.c.l.b16 %v60
    %v109 = vunpack.c.l.b16 %v61
    %v110 = vunpack.c.l.b16 %v62
    %v111 = vpack.c.b16 %v96, %v95
    %v112 = vpack.c.b16 %v98, %v97
    %v113 = vpack.c.b16 %v100, %v99
    %v114 = vpack.c.b16 %v102, %v101
    %v115 = vpack.c.b16 %v104, %v103
    %v116 = vpack.c.b16 %v106, %v105
    %v117 = vpack.c.b16 %v108, %v107
    %v118 = vpack.c.b16 %v110, %v109
    %v143 = vunpack.c.l.b16 %v63
    %v144 = vunpack.c.h.b16 %v63
    %v145 = vunpack.c.l.b16 %v64
    %v146 = vunpack.c.h.b16 %v64
    %v147 = vunpack.c.l.b16 %v65
    %v148 = vunpack.c.h.b16 %v65
    %v149 = vunpack.c.l.b16 %v66
    %v150 = vunpack.c.h.b16 %v66
    %v151 = vunpack.c.l.b16 %v67
    %v152 = vunpack.c.h.b16 %v67
    %v153 = vunpack.c.l.b16 %v68
    %v154 = vunpack.c.h.b16 %v68
    %v155 = vunpack.c.l.b16 %v69
    %v156 = vunpack.c.h.b16 %v69
    %v157 = vunpack.c.l.b16 %v70
    %v158 = vunpack.c.h.b16 %v70
    %v159 = vunpack.c.l.b16 %v71
    %v160 = vunpack.c.h.b16 %v71
    %v161 = vunpack.c.l.b16 %v72
    %v162 = vunpack.c.h.b16 %v72
    %v163 = vunpack.c.l.b16 %v73
    %v164 = vunpack.c.h.b16 %v73
    %v165 = vunpack.c.l.b16 %v74
    %v166 = vunpack.c.h.b16 %v74
    %v167 = vunpack.c.l.b16 %v75
    %v168 = vunpack.c.h.b16 %v75
    %v169 = vunpack.c.l.b16 %v76
    %v170 = vunpack.c.h.b16 %v76
    %v171 = vunpack.c.l.b16 %v77
    %v172 = vunpack.c.h.b16 %v77
    %v173 = vunpack.c.l.b16 %v78
    %v174 = vunpack.c.h.b16 %v78
    %v175 = vpack.c.b16 %v145, %v143
    %v176 = vpack.c.b16 %v146, %v144
    %v177 = vpack.c.b16 %v149, %v147
    %v178 = vpack.c.b16 %v150, %v148
    %v179 = vpack.c.b16 %v153, %v151
    %v180 = vpack.c.b16 %v154, %v152
    %v181 = vpack.c.b16 %v157, %v155
    %v182 = vpack.c.b16 %v158, %v156
    %v183 = vpack.c.b16 %v161, %v159
    %v184 = vpack.c.b16 %v162, %v160
    %v185 = vpack.c.b16 %v165, %v163
    %v186 = vpack.c.b16 %v166, %v164
    %v187 = vpack.c.b16 %v169, %v167
    %v188 = vpack.c.b16 %v170, %v168
    %v189 = vpack.c.b16 %v173, %v171
    %v190 = vpack.c.b16 %v174, %v172
    %207 = vmatpush.bf16.msra.mxu0 %v189
    %208 = vmatpush.bf16.msra.mxu0 %v187
    %209 = vmatpush.bf16.msra.mxu0 %v185
    %210 = vmatpush.bf16.msra.mxu0 %v183
    %211 = vmatpush.bf16.msra.mxu0 %v181
    %212 = vmatpush.bf16.msra.mxu0 %v179
    %213 = vmatpush.bf16.msra.mxu0 %v177
    %214 = vmatpush.bf16.msra.mxu0 %v175
    %215 = vmatmul.bf16.gmra.mxu0 %v111
    %v216 = vpop.f32.mrf.mxu0
    %v217 = vadd.f32 0.0, %v216
    %v218 = vpop.f32.mrf.mxu0
    %v219 = vadd.f32 0.0, %v218
    %220 = vmatmul.bf16.gmra.mxu0 %v112
    %v221 = vpop.f32.mrf.mxu0
    %v222 = vadd.f32 0.0, %v221
    %v223 = vpop.f32.mrf.mxu0
    %v224 = vadd.f32 0.0, %v223
    %225 = vmatmul.bf16.gmra.mxu0 %v113
    %v226 = vpop.f32.mrf.mxu0
    %v227 = vadd.f32 0.0, %v226
    %v228 = vpop.f32.mrf.mxu0
    %v229 = vadd.f32 0.0, %v228
    %230 = vmatmul.bf16.gmra.mxu0 %v114
    %v231 = vpop.f32.mrf.mxu0
    %v232 = vadd.f32 0.0, %v231
    %v233 = vpop.f32.mrf.mxu0
    %v234 = vadd.f32 0.0, %v233
    %235 = vmatmul.bf16.gmra.mxu0 %v115
    %v236 = vpop.f32.mrf.mxu0
    %v237 = vadd.f32 0.0, %v236
    %v238 = vpop.f32.mrf.mxu0
    %v239 = vadd.f32 0.0, %v238
    %240 = vmatmul.bf16.gmra.mxu0 %v116
    %v241 = vpop.f32.mrf.mxu0
    %v242 = vadd.f32 0.0, %v241
    %v243 = vpop.f32.mrf.mxu0
    %v244 = vadd.f32 0.0, %v243
    %245 = vmatmul.bf16.gmra.mxu0 %v117
    %v246 = vpop.f32.mrf.mxu0
    %v247 = vadd.f32 0.0, %v246
    %v248 = vpop.f32.mrf.mxu0
    %v249 = vadd.f32 0.0, %v248
    %250 = vmatmul.bf16.gmra.mxu0 %v118
    %v251 = vpop.f32.mrf.mxu0
    %v252 = vadd.f32 0.0, %v251
    %v253 = vpop.f32.mrf.mxu0
    %v254 = vadd.f32 0.0, %v253
    %255 = vdwg.mxu0
    %256 = vmatpush.bf16.msra.mxu0 %v190
    %257 = vmatpush.bf16.msra.mxu0 %v188
    %258 = vmatpush.bf16.msra.mxu0 %v186
    %259 = vmatpush.bf16.msra.mxu0 %v184
    %260 = vmatpush.bf16.msra.mxu0 %v182
    %261 = vmatpush.bf16.msra.mxu0 %v180
    %262 = vmatpush.bf16.msra.mxu0 %v178
    %263 = vmatpush.bf16.msra.mxu0 %v176
    %264 = vmatmul.bf16.gmra.mxu0 %v111
    %v265 = vpop.f32.mrf.mxu0
    %v266 = vadd.f32 0.0, %v265
    %v267 = vpop.f32.mrf.mxu0
    %v268 = vadd.f32 0.0, %v267
    %269 = vmatmul.bf16.gmra.mxu0 %v112
    %v270 = vpop.f32.mrf.mxu0
    %v271 = vadd.f32 0.0, %v270
    %v272 = vpop.f32.mrf.mxu0
    %v273 = vadd.f32 0.0, %v272
    %274 = vmatmul.bf16.gmra.mxu0 %v113
    %v275 = vpop.f32.mrf.mxu0
    %v276 = vadd.f32 0.0, %v275
    %v277 = vpop.f32.mrf.mxu0
    %v278 = vadd.f32 0.0, %v277
    %279 = vmatmul.bf16.gmra.mxu0 %v114
    %v280 = vpop.f32.mrf.mxu0
    %v281 = vadd.f32 0.0, %v280
    %v282 = vpop.f32.mrf.mxu0
    %v283 = vadd.f32 0.0, %v282
    %284 = vmatmul.bf16.gmra.mxu0 %v115
    %v285 = vpop.f32.mrf.mxu0
    %v286 = vadd.f32 0.0, %v285
    %v287 = vpop.f32.mrf.mxu0
    %v288 = vadd.f32 0.0, %v287
    %289 = vmatmul.bf16.gmra.mxu0 %v116
    %v290 = vpop.f32.mrf.mxu0
    %v291 = vadd.f32 0.0, %v290
    %v292 = vpop.f32.mrf.mxu0
    %v293 = vadd.f32 0.0, %v292
    %294 = vmatmul.bf16.gmra.mxu0 %v117
    %v295 = vpop.f32.mrf.mxu0
    %v296 = vadd.f32 0.0, %v295
    %v297 = vpop.f32.mrf.mxu0
    %v298 = vadd.f32 0.0, %v297
    %299 = vmatmul.bf16.gmra.mxu0 %v118
    %v300 = vpop.f32.mrf.mxu0
    %v301 = vadd.f32 0.0, %v300
    %v302 = vpop.f32.mrf.mxu0
    %v303 = vadd.f32 0.0, %v302
    %304 = vdwg.mxu0
    %305 = vst [vmem:[#allocation7] sm:$0xff] %v217
    %306 = vst [vmem:[#allocation7 + $0x8] sm:$0xff] %v219
    %307 = vst [vmem:[#allocation7 + $0x10] sm:$0xff] %v222
    %308 = vst [vmem:[#allocation7 + $0x18] sm:$0xff] %v224
    %309 = vst [vmem:[#allocation7 + $0x20] sm:$0xff] %v227
    %310 = vst [vmem:[#allocation7 + $0x28] sm:$0xff] %v229
    %311 = vst [vmem:[#allocation7 + $0x30] sm:$0xff] %v232
    %312 = vst [vmem:[#allocation7 + $0x38] sm:$0xff] %v234
    %313 = vst [vmem:[#allocation7 + $0x40] sm:$0xff] %v237
    %314 = vst [vmem:[#allocation7 + $0x48] sm:$0xff] %v239
    %315 = vst [vmem:[#allocation7 + $0x50] sm:$0xff] %v242
    %316 = vst [vmem:[#allocation7 + $0x58] sm:$0xff] %v244
    %317 = vst [vmem:[#allocation7 + $0x60] sm:$0xff] %v247
    %318 = vst [vmem:[#allocation7 + $0x68] sm:$0xff] %v249
    %319 = vst [vmem:[#allocation7 + $0x70] sm:$0xff] %v252
    %320 = vst [vmem:[#allocation7 + $0x78] sm:$0xff] %v254
    %321 = vst [vmem:[#allocation8] sm:$0xff] %v266
    %322 = vst [vmem:[#allocation8 + $0x8] sm:$0xff] %v268
    %323 = vst [vmem:[#allocation8 + $0x10] sm:$0xff] %v271
    %324 = vst [vmem:[#allocation8 + $0x18] sm:$0xff] %v273
    %325 = vst [vmem:[#allocation8 + $0x20] sm:$0xff] %v276
    %326 = vst [vmem:[#allocation8 + $0x28] sm:$0xff] %v278
    %327 = vst [vmem:[#allocation8 + $0x30] sm:$0xff] %v281
    %328 = vst [vmem:[#allocation8 + $0x38] sm:$0xff] %v283
    %329 = vst [vmem:[#allocation8 + $0x40] sm:$0xff] %v286
    %330 = vst [vmem:[#allocation8 + $0x48] sm:$0xff] %v288
    %331 = vst [vmem:[#allocation8 + $0x50] sm:$0xff] %v291
    %332 = vst [vmem:[#allocation8 + $0x58] sm:$0xff] %v293
    %333 = vst [vmem:[#allocation8 + $0x60] sm:$0xff] %v296
    %334 = vst [vmem:[#allocation8 + $0x68] sm:$0xff] %v298
    %335 = vst [vmem:[#allocation8 + $0x70] sm:$0xff] %v301
    %336 = vst [vmem:[#allocation8 + $0x78] sm:$0xff] %v303
    // Predicated region
    $region18: #{tpu_custom_call.1} parent=1 // pred_check
      _
    $region19: #{tpu_custom_call.1} parent=1 // pred_check_branch
      %338 = sbr.rel (0) target = $region21
    $region20: #{tpu_custom_call.1} parent=1 // pred_region
      %340 = vsyncadd [#allocation4], 0
      %s341 = sshll.u32 [#allocation7], 4
      %s342 = int_to_ptr.vmem [resolvable:$true] %s341
      %s343 = sshll.u32 %s2, 4
      %s344 = int_to_ptr.hbm [resolvable:$true] %s343
      %349 = dma.vmem_to_hbm [thread:$0]  %s342, 2048, %s344, [#allocation4], 128, 128, 8
    $region21: #{tpu_custom_call.1} parent=1 // pred_fallthru
      _
    // Predicated region
    $region22: #{tpu_custom_call.1} parent=1 // pred_check
      _
    $region23: #{tpu_custom_call.1} parent=1 // pred_check_branch
      %351 = sbr.rel (0) target = $region25
    $region24: #{tpu_custom_call.1} parent=1 // pred_region
      %353 = vsyncadd [#allocation9], 0
      %s354 = sshll.u32 [#allocation8], 4
      %s355 = int_to_ptr.vmem [resolvable:$true] %s354
      %s356 = sshll.u32 %s3, 4
      %s357 = int_to_ptr.hbm [resolvable:$true] %s356
      %362 = dma.vmem_to_hbm [thread:$0]  %s355, 2048, %s357, [#allocation9], 128, 128, 8
    $region25: #{tpu_custom_call.1} parent=1 // pred_fallthru
      _
    // Predicated region
    $region26: #{tpu_custom_call.1} parent=1 // pred_check
      _
    $region27: #{tpu_custom_call.1} parent=1 // pred_check_branch
      %364 = sbr.rel (0) target = $region29
    $region28: #{tpu_custom_call.1} parent=1 // pred_region
      %366 = dma.done [#allocation4], 2048
    $region29: #{tpu_custom_call.1} parent=1 // pred_fallthru
      _
    // Predicated region
    $region30: #{tpu_custom_call.1} parent=1 // pred_check
      _
    $region31: #{tpu_custom_call.1} parent=1 // pred_check_branch
      %368 = sbr.rel (0) target = $region33
    $region32: #{tpu_custom_call.1} parent=1 // pred_region
      %370 = dma.done [#allocation9], 2048
    $region33: #{tpu_custom_call.1} parent=1 // pred_fallthru
      _
    %371 = vsyncpa [#allocation3], 1
    %372 = vsyncpa [#allocation6], 1
    %373 = vsyncpa [#allocation4], 1
    %374 = vsyncpa [#allocation9], 1

</llo_original>
